<compile_context>
chip_gen: v7x
topology: tpu7x:2x2x1
jax: 0.10.0
libtpu: 0.0.40
codegen_flags: <defaults>
</compile_context>

<pallas_src>
import functools
import math

import jax
import jax.numpy as jnp
import numpy as np
from jax.experimental import pallas as pl
from jax.experimental.pallas import tpu as pltpu


# ---------------------------------------------------------------------------
# Kernels
# ---------------------------------------------------------------------------

def _stats_kernel(count_ref, x_ref, mean_ref, var_ref,
                  new_mean_ref, new_var_ref, new_std_ref,
                  s1_ref, s2_ref, *, batch_size):
    """Streaming shifted-sum batch stats + Chan running-stat merge.

    grid = (feature tiles [parallel], batch tiles [arbitrary]).
    s1/s2 are (1, TD) VMEM accumulators resident across the batch axis.
    """
    b = pl.program_id(1)
    nb = pl.num_programs(1)

    @pl.when(b == 0)
    def _():
        s1_ref[...] = jnp.zeros_like(s1_ref)
        s2_ref[...] = jnp.zeros_like(s2_ref)

    x = x_ref[...].astype(jnp.float32)            # (TB, TD)
    mean = mean_ref[...]                          # (1, TD), resident across b
    d = x - mean                                  # shifted by the running mean
    # TODO(synk): if v7x profiling shows the XLU/VALU slots saturating, offload
    # these sublane reductions to the idle MXU via ones(1,TB) @ d / @ (d*d).
    s1_ref[...] += jnp.sum(d, axis=0, keepdims=True)
    s2_ref[...] += jnp.sum(d * d, axis=0, keepdims=True)

    @pl.when(b == nb - 1)
    def _():
        cnt = count_ref[0].astype(jnp.float32)
        bs = jnp.float32(batch_size)
        new_cnt = cnt + bs

        dm = s1_ref[...] / bs                     # = batch_mean - running_mean
        batch_var = jnp.maximum(s2_ref[...] / bs - dm * dm, 0.0)

        mean_new = mean_ref[...] + (bs / new_cnt) * dm
        delta2 = dm * (cnt / new_cnt)             # = batch_mean - mean_new
        # Chan merge; for cnt == 0 this reduces exactly to batch_var.
        m2 = (var_ref[...] * cnt + batch_var * bs
              + delta2 * delta2 * (cnt * bs / new_cnt))
        var_new = m2 / new_cnt

        new_mean_ref[...] = mean_new
        new_var_ref[...] = var_new
        new_std_ref[...] = jnp.sqrt(var_new)


def _normalize_kernel(x_ref, mean_ref, std_ref, y_ref, *, eps, center):
    """y = (x - mean) / (std + eps)  (or x / (std + eps) when center=False)."""
    x = x_ref[...].astype(jnp.float32)
    inv = 1.0 / (std_ref[...] + jnp.float32(eps))   # (1, TD) row only
    if center:
        y = (x - mean_ref[...]) * inv
    else:
        y = x * inv
    y_ref[...] = y.astype(y_ref.dtype)


# ---------------------------------------------------------------------------
# Generation-aware sizing
# ---------------------------------------------------------------------------

def _round_up(x, m):
    return -(-x // m) * m


def _vmem_params():
    """(block working-set budget, scoped vmem limit) by TPU generation."""
    try:
        cap = int(pltpu.get_tpu_info().vmem_capacity_bytes)
    except Exception:
        cap = None
    if cap is not None and cap >= 100 * (1 << 20):      # v5e / v6e: 128 MiB VMEM
        return 32 * (1 << 20), 64 * (1 << 20)
    return 16 * (1 << 20), 48 * (1 << 20)               # v7x (64 MiB) / unknown


def _pick_feature_tile(dp):
    """Largest 128-multiple divisor of dp, capped so the parallel feature axis
    has >=2 blocks when dp >= 256 (v7x has 2 TensorCores) and capped at 512 so
    the batch tile gets the VMEM."""
    cap = dp // 2 if dp >= 256 else dp
    cap = min(max(cap, 128), 512)
    best = 128
    for td in range(128, dp + 1, 128):
        if dp % td == 0 and td <= cap:
            best = td
    return best


def _pick_batch_tile(batch, td, itemsize, budget):
    """Multiple-of-8 batch tile whose double-buffered x+y blocks fit `budget`."""
    per_row = 4 * td * max(int(itemsize), 4)     # 2 bufs x (x blk + y blk), f32-ish
    max_tb = max(8, (budget // per_row) // 8 * 8)
    tb = min(max_tb, 1024)                       # keep >=several grid steps at scale
    tb = min(tb, _round_up(batch, 8))
    return max(tb, 8)


# ---------------------------------------------------------------------------
# Module wrapper (functional state)
# ---------------------------------------------------------------------------

class EmpiricalNormalization:
    """JAX/Pallas port of fast_td3 EmpiricalNormalization (forward + update)."""

    def __init__(self, shape, eps=0.01, until=None):
        if isinstance(shape, int):
            shape = (shape,)
        self.shape = tuple(shape)
        self.feat_dim = int(math.prod(self.shape))
        self.eps = float(eps)
        self.until = until
        self.training = True

        self._Dp = _round_up(self.feat_dim, 128)
        Dp = self._Dp
        self._mean = jnp.zeros((1, Dp), jnp.float32)
        self._var = jnp.ones((1, Dp), jnp.float32)
        self._std = jnp.ones((1, Dp), jnp.float32)
        # Host-side Python int: no per-step device<->host sync.
        # TODO(synk): torch uses int64; the int32 prefetch / float32 ratios lose
        # precision beyond ~2^24 accumulated samples (use a two-word count).
        self.count = 0

        self._budget, self._vmem_limit = _vmem_params()
        self._call_cache = {}

    # -- exposed buffers ------------------------------------------------------

    @property
    def mean(self):
        return self._mean[0, :self.feat_dim].reshape(self.shape)

    @property
    def std(self):
        return self._std[0, :self.feat_dim].reshape(self.shape)

    def inverse(self, y):
        B = y.shape[0]
        std = self._std[:, :self.feat_dim]
        mean = self._mean[:, :self.feat_dim]
        return (y.reshape(B, -1) * (std + self.eps) + mean).reshape(y.shape)

    # -- pallas_call builders -------------------------------------------------

    def _build_stats_call(self, B, Bp, Dp, TB, TD, dtype):
        nf, nb = Dp // TD, Bp // TB
        kernel = functools.partial(_stats_kernel, batch_size=B)
        grid_spec = pltpu.PrefetchScalarGridSpec(
            num_scalar_prefetch=1,                               # count -> SMEM
            grid=(nf, nb),
            in_specs=[
                # TODO(synk): sweep pipeline_mode=pl.Buffered(3) on this stream
                # if xprof shows exposed DMA.
                pl.BlockSpec((TB, TD), lambda j, b, cnt: (b, j)),   # x
                pl.BlockSpec((1, TD), lambda j, b, cnt: (0, j)),    # running mean
                pl.BlockSpec((1, TD), lambda j, b, cnt: (0, j)),    # running var
            ],
            out_specs=[
                pl.BlockSpec((1, TD), lambda j, b, cnt: (0, j)),    # new mean
                pl.BlockSpec((1, TD), lambda j, b, cnt: (0, j)),    # new var
                pl.BlockSpec((1, TD), lambda j, b, cnt: (0, j)),    # new std
            ],
            scratch_shapes=[pltpu.VMEM((1, TD), jnp.float32),
                            pltpu.VMEM((1, TD), jnp.float32)],
        )
        itemsize = np.dtype(dtype).itemsize
        cost = pl.CostEstimate(
            flops=int(4 * Bp * Dp + 16 * Dp),
            transcendentals=int(Dp),
            bytes_accessed=int(Bp * Dp * itemsize + 6 * Dp * 4))
        return pl.pallas_call(
            kernel,
            grid_spec=grid_spec,
            out_shape=[jax.ShapeDtypeStruct((1, Dp), jnp.float32)] * 3,
            compiler_params=pltpu.CompilerParams(
                dimension_semantics=("parallel", "arbitrary"),
                vmem_limit_bytes=self._vmem_limit),
            cost_estimate=cost,
        )

    def _build_norm_call(self, Bp, Dp, TB, TD, dtype, center):
        nf, nb = Dp // TD, Bp // TB
        kernel = functools.partial(_normalize_kernel, eps=self.eps, center=center)
        itemsize = np.dtype(dtype).itemsize
        cost = pl.CostEstimate(
            flops=int(3 * Bp * Dp),
            transcendentals=int(Dp),
            bytes_accessed=int(2 * Bp * Dp * itemsize + 2 * Dp * 4))
        return pl.pallas_call(
            kernel,
            grid=(nf, nb),
            in_specs=[
                pl.BlockSpec((TB, TD), lambda j, b: (b, j)),   # x
                pl.BlockSpec((1, TD), lambda j, b: (0, j)),    # mean (resident)
                pl.BlockSpec((1, TD), lambda j, b: (0, j)),    # std  (resident)
            ],
            out_specs=pl.BlockSpec((TB, TD), lambda j, b: (b, j)),
            out_shape=jax.ShapeDtypeStruct((Bp, Dp), dtype),
            compiler_params=pltpu.CompilerParams(
                dimension_semantics=("parallel", "parallel"),
                vmem_limit_bytes=self._vmem_limit),
            cost_estimate=cost,
        )

    # -- forward --------------------------------------------------------------

    def __call__(self, x, center=True):
        if x.shape[1:] != self.shape:
            raise ValueError(
                f"Expected input of shape (*,{self.shape}), got {x.shape}")
        B = int(x.shape[0])
        D = self.feat_dim
        Dp = self._Dp

        x2 = x.reshape(B, D)
        if Dp != D:                                   # lane-dense padding
            x2 = jnp.pad(x2, ((0, 0), (0, Dp - D)))

        TD = _pick_feature_tile(Dp)
        TB = _pick_batch_tile(B, TD, np.dtype(x2.dtype).itemsize, self._budget)
        Bp = _round_up(B, TB)
        if Bp != B:
            # Pad rows with the running mean: their shifted sums are exactly 0,
            # so the stats kernel needs no masking; rows are sliced off below.
            pad_rows = jnp.broadcast_to(self._mean.astype(x2.dtype), (Bp - B, Dp))
            x2 = jnp.concatenate([x2, pad_rows], axis=0)

        dkey = np.dtype(x2.dtype).name
        do_update = self.training and (self.until is None
                                       or self.count < self.until)

        if do_update:
            skey = ("stats", B, Bp, Dp, TB, TD, dkey)
            stats_call = self._call_cache.get(skey)
            if stats_call is None:
                stats_call = self._build_stats_call(B, Bp, Dp, TB, TD, x2.dtype)
                self._call_cache[skey] = stats_call
            count_in = jnp.asarray([self.count], jnp.int32)
            new_mean, new_var, new_std = stats_call(
                count_in, x2, self._mean, self._var)
            self._mean, self._var, self._std = new_mean, new_var, new_std
            self.count += B                           # host-side bookkeeping

        nkey = ("norm", Bp, Dp, TB, TD, dkey, bool(center))
        norm_call = self._call_cache.get(nkey)
        if norm_call is None:
            norm_call = self._build_norm_call(Bp, Dp, TB, TD, x2.dtype, center)
            self._call_cache[nkey] = norm_call
        y = norm_call(x2, self._mean, self._std)

        y = y[:B, :D]
        return y.reshape(x.shape)


# ---------------------------------------------------------------------------
# Pure-numpy reference mirroring the PyTorch module
# ---------------------------------------------------------------------------

def _ref_forward(x, state, eps, until, center, training):
    mean, var, std, count = state
    x = np.asarray(x, np.float32)
    if training and not (until is not None and count >= until):
        B = x.shape[0]
        batch_mean = x.mean(0, keepdims=True)
        new_count = count + B
        delta = batch_mean - mean
        mean = mean + (B / new_count) * delta
        if count > 0:
            batch_var = ((x - batch_mean) ** 2).mean(0, keepdims=True)
            delta2 = batch_mean - mean
            m2 = var * count + batch_var * B + delta2 ** 2 * (count * B / new_count)
            var = m2 / new_count
        else:
            var = ((x - mean) ** 2).mean(0, keepdims=True)
        std = np.sqrt(var)
        count = new_count
    y = (x - mean) / (std + eps) if center else x / (std + eps)
    return y, (mean, var, std, count)


if __name__ == "__main__":
    def run_case(feat_shape, B):
        norm = EmpiricalNormalization(feat_shape, eps=0.01, until=None)
        D = norm.feat_dim
        ref_state = (np.zeros((1, D), np.float32), np.ones((1, D), np.float32),
                     np.ones((1, D), np.float32), 0)
        key = jax.random.PRNGKey(0)

        # Two training steps: exercises count==0 and count>0 merge paths.
        for step in range(2):
            key, sub = jax.random.split(key)
            x = (jax.random.normal(sub, (B,) + tuple(norm.shape), jnp.float32)
                 * (step + 1.5) + step)
            y = jax.block_until_ready(norm(x, center=True))
            y_ref, ref_state = _ref_forward(
                np.asarray(x).reshape(B, D), ref_state, norm.eps, norm.until,
                center=True, training=True)
            np.testing.assert_allclose(np.asarray(y).reshape(B, D), y_ref,
                                       rtol=1e-4, atol=1e-4)
            np.testing.assert_allclose(np.asarray(norm.mean).reshape(-1),
                                       ref_state[0].reshape(-1),
                                       rtol=1e-4, atol=1e-4)
            np.testing.assert_allclose(np.asarray(norm.std).reshape(-1),
                                       ref_state[2].reshape(-1),
                                       rtol=1e-4, atol=1e-4)

        # Eval-mode (inference) step, uncentered -> normalize-only path.
        norm.training = False
        key, sub = jax.random.split(key)
        x = jax.random.normal(sub, (B,) + tuple(norm.shape), jnp.float32)
        y = jax.block_until_ready(norm(x, center=False))
        y_ref, _ = _ref_forward(np.asarray(x).reshape(B, D), ref_state, norm.eps,
                                norm.until, center=False, training=False)
        np.testing.assert_allclose(np.asarray(y).reshape(B, D), y_ref,
                                   rtol=1e-4, atol=1e-4)

    run_case((4, 64), 32)    # D=256 lane-aligned -> 2 parallel feature blocks
    run_case((3, 40), 30)    # D=120 -> padded to 128; B=30 -> padded batch rows

    # Saturated-`until` training step: update skipped, normalize-only kernel.
    norm_sat = EmpiricalNormalization((8, 16), eps=0.01, until=16)
    norm_sat.count = 16
    x = jax.random.normal(jax.random.PRNGKey(1), (32, 8, 16), jnp.float32)
    y = jax.block_until_ready(norm_sat(x, center=True))
    y_ref, _ = _ref_forward(np.asarray(x).reshape(32, 128),
                            (np.zeros((1, 128), np.float32),
                             np.ones((1, 128), np.float32),
                             np.ones((1, 128), np.float32), 16),
                            norm_sat.eps, norm_sat.until,
                            center=True, training=True)
    np.testing.assert_allclose(np.asarray(y).reshape(32, 128), y_ref,
                               rtol=1e-4, atol=1e-4)

    print("KERNEL_OK")
</pallas_src>

<mosaic_0001>
module attributes {stable_mosaic.version = 11 : i64} {
  func.func @_stats_kernel(%arg0: i32, %arg1: i32, %arg2: memref<1xi32, #tpu.memory_space<smem>>, %arg3: memref<32x128xf32, #tpu.memory_space<vmem>>, %arg4: memref<1x128xf32, #tpu.memory_space<vmem>>, %arg5: memref<1x128xf32, #tpu.memory_space<vmem>>, %arg6: memref<1x128xf32, #tpu.memory_space<vmem>>, %arg7: memref<1x128xf32, #tpu.memory_space<vmem>>, %arg8: memref<1x128xf32, #tpu.memory_space<vmem>>, %arg9: memref<1x128xf32, #tpu.memory_space<vmem>>, %arg10: memref<1x128xf32, #tpu.memory_space<vmem>>) attributes {dimension_semantics = [#tpu.dimension_semantics<parallel>, #tpu.dimension_semantics<arbitrary>], iteration_bounds = array<i64: 2, 1>, scalar_prefetch = 1 : i64, scratch_operands = 2 : i64, tpu.core_type = #tpu.core_type<tc>, window_params = [{transform_indices = @transform_0, window_bounds = array<i64: 32, 128>}, {transform_indices = @transform_1, window_bounds = array<i64: 1, 128>}, {transform_indices = @transform_2, window_bounds = array<i64: 1, 128>}, {transform_indices = @transform_3, window_bounds = array<i64: 1, 128>}, {transform_indices = @transform_4, window_bounds = array<i64: 1, 128>}, {transform_indices = @transform_5, window_bounds = array<i64: 1, 128>}]} {
    %c0_i32 = arith.constant 0 : i32
    %0 = arith.cmpi eq, %arg1, %c0_i32 : i32
    %1 = arith.extui %0 : i1 to i32
    %c0_i32_0 = arith.constant 0 : i32
    %2 = arith.cmpi ne, %1, %c0_i32_0 : i32
    scf.if %2 {
      %cst_15 = arith.constant 0.000000e+00 : f32
      %21 = vector.broadcast %cst_15 : f32 to vector<1x128xf32>
      %c0_16 = arith.constant 0 : index
      %c0_17 = arith.constant 0 : index
      %22 = vector.load %arg9[%c0_16, %c0_17] : memref<1x128xf32, #tpu.memory_space<vmem>>, vector<1x128xf32>
      tpu.vector_store %arg9[%c0_16, %c0_17], %21 {strides = array<i32>} : memref<1x128xf32, #tpu.memory_space<vmem>>, vector<1x128xf32>,
      %cst_18 = arith.constant 0.000000e+00 : f32
      %23 = vector.broadcast %cst_18 : f32 to vector<1x128xf32>
      %c0_19 = arith.constant 0 : index
      %c0_20 = arith.constant 0 : index
      %24 = vector.load %arg10[%c0_19, %c0_20] : memref<1x128xf32, #tpu.memory_space<vmem>>, vector<1x128xf32>
      tpu.vector_store %arg10[%c0_19, %c0_20], %23 {strides = array<i32>} : memref<1x128xf32, #tpu.memory_space<vmem>>, vector<1x128xf32>,
    } else {
    }
    %c0 = arith.constant 0 : index
    %c0_1 = arith.constant 0 : index
    %3 = vector.load %arg3[%c0, %c0_1] : memref<32x128xf32, #tpu.memory_space<vmem>>, vector<32x128xf32>
    %c0_2 = arith.constant 0 : index
    %c0_3 = arith.constant 0 : index
    %4 = vector.load %arg4[%c0_2, %c0_3] : memref<1x128xf32, #tpu.memory_space<vmem>>, vector<1x128xf32>
    %5 = vector.broadcast %4 : vector<1x128xf32> to vector<32x128xf32>
    %6 = arith.subf %3, %5 : vector<32x128xf32>
    %c0_4 = arith.constant 0 : index
    %c0_5 = arith.constant 0 : index
    %7 = vector.load %arg9[%c0_4, %c0_5] : memref<1x128xf32, #tpu.memory_space<vmem>>, vector<1x128xf32>
    %cst = arith.constant dense<0.000000e+00> : vector<128xf32>
    %8 = vector.multi_reduction <add>, %6, %cst [0] : vector<32x128xf32> to vector<128xf32>
    %9 = vector.shape_cast %8 : vector<128xf32> to vector<1x128xf32>
    %10 = arith.addf %7, %9 : vector<1x128xf32>
    %c0_6 = arith.constant 0 : index
    %c0_7 = arith.constant 0 : index
    %11 = vector.load %arg9[%c0_6, %c0_7] : memref<1x128xf32, #tpu.memory_space<vmem>>, vector<1x128xf32>
    tpu.vector_store %arg9[%c0_6, %c0_7], %10 {strides = array<i32>} : memref<1x128xf32, #tpu.memory_space<vmem>>, vector<1x128xf32>,
    %c0_8 = arith.constant 0 : index
    %c0_9 = arith.constant 0 : index
    %12 = vector.load %arg10[%c0_8, %c0_9] : memref<1x128xf32, #tpu.memory_space<vmem>>, vector<1x128xf32>
    %13 = arith.mulf %6, %6 : vector<32x128xf32>
    %cst_10 = arith.constant dense<0.000000e+00> : vector<128xf32>
    %14 = vector.multi_reduction <add>, %13, %cst_10 [0] : vector<32x128xf32> to vector<128xf32>
    %15 = vector.shape_cast %14 : vector<128xf32> to vector<1x128xf32>
    %16 = arith.addf %12, %15 : vector<1x128xf32>
    %c0_11 = arith.constant 0 : index
    %c0_12 = arith.constant 0 : index
    %17 = vector.load %arg10[%c0_11, %c0_12] : memref<1x128xf32, #tpu.memory_space<vmem>>, vector<1x128xf32>
    tpu.vector_store %arg10[%c0_11, %c0_12], %16 {strides = array<i32>} : memref<1x128xf32, #tpu.memory_space<vmem>>, vector<1x128xf32>,
    %c0_i32_13 = arith.constant 0 : i32
    %18 = arith.cmpi eq, %arg1, %c0_i32_13 : i32
    %19 = arith.extui %18 : i1 to i32
    %c0_i32_14 = arith.constant 0 : i32
    %20 = arith.cmpi ne, %19, %c0_i32_14 : i32
    scf.if %20 {
      %c0_15 = arith.constant 0 : index
      %21 = memref.load %arg2[%c0_15] : memref<1xi32, #tpu.memory_space<smem>>
      %22 = arith.sitofp %21 : i32 to f32
      %cst_16 = arith.constant 3.200000e+01 : f32
      %23 = arith.addf %22, %cst_16 : f32
      %c0_17 = arith.constant 0 : index
      %c0_18 = arith.constant 0 : index
      %24 = vector.load %arg9[%c0_17, %c0_18] : memref<1x128xf32, #tpu.memory_space<vmem>>, vector<1x128xf32>
      %cst_19 = arith.constant 3.200000e+01 : f32
      %25 = vector.broadcast %cst_19 : f32 to vector<1x128xf32>
      %26 = arith.divf %24, %25 : vector<1x128xf32>
      %c0_20 = arith.constant 0 : index
      %c0_21 = arith.constant 0 : index
      %27 = vector.load %arg10[%c0_20, %c0_21] : memref<1x128xf32, #tpu.memory_space<vmem>>, vector<1x128xf32>
      %cst_22 = arith.constant 3.200000e+01 : f32
      %28 = vector.broadcast %cst_22 : f32 to vector<1x128xf32>
      %29 = arith.divf %27, %28 : vector<1x128xf32>
      %30 = arith.mulf %26, %26 : vector<1x128xf32>
      %31 = arith.subf %29, %30 : vector<1x128xf32>
      %cst_23 = arith.constant 0.000000e+00 : f32
      %32 = vector.broadcast %cst_23 : f32 to vector<1x128xf32>
      %33 = arith.maximumf %31, %32 : vector<1x128xf32>
      %c0_24 = arith.constant 0 : index
      %c0_25 = arith.constant 0 : index
      %34 = vector.load %arg4[%c0_24, %c0_25] : memref<1x128xf32, #tpu.memory_space<vmem>>, vector<1x128xf32>
      %cst_26 = arith.constant 3.200000e+01 : f32
      %35 = arith.divf %cst_26, %23 : f32
      %36 = vector.broadcast %35 : f32 to vector<1x128xf32>
      %37 = arith.mulf %36, %26 : vector<1x128xf32>
      %38 = arith.addf %34, %37 : vector<1x128xf32>
      %39 = arith.divf %22, %23 : f32
      %40 = vector.broadcast %39 : f32 to vector<1x128xf32>
      %41 = arith.mulf %26, %40 : vector<1x128xf32>
      %c0_27 = arith.constant 0 : index
      %c0_28 = arith.constant 0 : index
      %42 = vector.load %arg5[%c0_27, %c0_28] : memref<1x128xf32, #tpu.memory_space<vmem>>, vector<1x128xf32>
      %43 = vector.broadcast %22 : f32 to vector<1x128xf32>
      %44 = arith.mulf %42, %43 : vector<1x128xf32>
      %cst_29 = arith.constant 3.200000e+01 : f32
      %45 = vector.broadcast %cst_29 : f32 to vector<1x128xf32>
      %46 = arith.mulf %33, %45 : vector<1x128xf32>
      %47 = arith.addf %44, %46 : vector<1x128xf32>
      %48 = arith.mulf %41, %41 : vector<1x128xf32>
      %cst_30 = arith.constant 3.200000e+01 : f32
      %49 = arith.mulf %22, %cst_30 : f32
      %50 = arith.divf %49, %23 : f32
      %51 = vector.broadcast %50 : f32 to vector<1x128xf32>
      %52 = arith.mulf %48, %51 : vector<1x128xf32>
      %53 = arith.addf %47, %52 : vector<1x128xf32>
      %54 = vector.broadcast %23 : f32 to vector<1x128xf32>
      %55 = arith.divf %53, %54 : vector<1x128xf32>
      %c0_31 = arith.constant 0 : index
      %c0_32 = arith.constant 0 : index
      %56 = vector.load %arg6[%c0_31, %c0_32] : memref<1x128xf32, #tpu.memory_space<vmem>>, vector<1x128xf32>
      tpu.vector_store %arg6[%c0_31, %c0_32], %38 {strides = array<i32>} : memref<1x128xf32, #tpu.memory_space<vmem>>, vector<1x128xf32>,
      %c0_33 = arith.constant 0 : index
      %c0_34 = arith.constant 0 : index
      %57 = vector.load %arg7[%c0_33, %c0_34] : memref<1x128xf32, #tpu.memory_space<vmem>>, vector<1x128xf32>
      tpu.vector_store %arg7[%c0_33, %c0_34], %55 {strides = array<i32>} : memref<1x128xf32, #tpu.memory_space<vmem>>, vector<1x128xf32>,
      %58 = math.sqrt %55 : vector<1x128xf32>
      %c0_35 = arith.constant 0 : index
      %c0_36 = arith.constant 0 : index
      %59 = vector.load %arg8[%c0_35, %c0_36] : memref<1x128xf32, #tpu.memory_space<vmem>>, vector<1x128xf32>
      tpu.vector_store %arg8[%c0_35, %c0_36], %58 {strides = array<i32>} : memref<1x128xf32, #tpu.memory_space<vmem>>, vector<1x128xf32>,
    } else {
    }
    return
  }
  func.func @transform_0(%arg0: i32, %arg1: i32, %arg2: memref<1xi32, #tpu.memory_space<smem>>) -> (i32, i32) {
    %c0_i32 = arith.constant 0 : i32
    return %arg1, %arg0 : i32, i32
  }
  func.func @transform_1(%arg0: i32, %arg1: i32, %arg2: memref<1xi32, #tpu.memory_space<smem>>) -> (i32, i32) {
    %c0_i32 = arith.constant 0 : i32
    %c0_i32_0 = arith.constant 0 : i32
    return %c0_i32, %arg0 : i32, i32
  }
  func.func @transform_2(%arg0: i32, %arg1: i32, %arg2: memref<1xi32, #tpu.memory_space<smem>>) -> (i32, i32) {
    %c0_i32 = arith.constant 0 : i32
    %c0_i32_0 = arith.constant 0 : i32
    return %c0_i32, %arg0 : i32, i32
  }
  func.func @transform_3(%arg0: i32, %arg1: i32, %arg2: memref<1xi32, #tpu.memory_space<smem>>) -> (i32, i32) {
    %c0_i32 = arith.constant 0 : i32
    %c0_i32_0 = arith.constant 0 : i32
    return %c0_i32, %arg0 : i32, i32
  }
  func.func @transform_4(%arg0: i32, %arg1: i32, %arg2: memref<1xi32, #tpu.memory_space<smem>>) -> (i32, i32) {
    %c0_i32 = arith.constant 0 : i32
    %c0_i32_0 = arith.constant 0 : i32
    return %c0_i32, %arg0 : i32, i32
  }
  func.func @transform_5(%arg0: i32, %arg1: i32, %arg2: memref<1xi32, #tpu.memory_space<smem>>) -> (i32, i32) {
    %c0_i32 = arith.constant 0 : i32
    %c0_i32_0 = arith.constant 0 : i32
    return %c0_i32, %arg0 : i32, i32
  }
}

</mosaic_0001>

<llo_original>
// kernel: tpu_custom_call.1
$region0: #{tpu_custom_call.1}
  #allocation0 [shape = 'u32[]', space=smem, size = 0x4, offset = 0x4, fixed_abs, tag = 'smem constant byte address 0x4 - core index']
  #allocation1 [shape = 'u32[144,128]{1,0:T(1,128)}', space=vmem, size = 0x12000, scoped, tag = 'internal scratch']
  #allocation2 [shape = 'f32[1,128]{1,0:T(1,128)}', space=vmem, size = 0x200, scoped, tag = 'scratch operand']
  #allocation3 [shape = 'f32[1,128]{1,0:T(1,128)}', space=vmem, size = 0x200, scoped, tag = 'scratch operand']
  #allocation4 [shape = 's32[1]{0}', space=sflag, size = 0x4, scoped, tag = 'scoped memory for tpu_custom_call.1']
  #allocation5 [shape = 's32[1]{0:T(128)S(6)}', space=smem, size = 0x200, scoped, tag = 'prefetched SMEM operand 0']
  %s0 = inlined_call_operand.<no memory space> [shape: s32[1], index: 0, kind: input, shape index: {}]
  %s1 = inlined_call_operand.hbm [shape: f32[32,256], index: 1, kind: input, shape index: {}]
  %s2 = inlined_call_operand.vmem [shape: f32[1,256], index: 2, kind: input, shape index: {}]
  %s3 = inlined_call_operand.vmem [shape: f32[1,256], index: 3, kind: input, shape index: {}]
  %s4 = inlined_call_operand.hbm [shape: f32[1,256], index: 4, kind: output, shape index: {0}]
  %s5 = inlined_call_operand.hbm [shape: f32[1,256], index: 5, kind: output, shape index: {1}]
  %s6 = inlined_call_operand.hbm [shape: f32[1,256], index: 6, kind: output, shape index: {2}]
  %7 = xla_tuple %s4, %s5, %s6
  %s8 = sld [smem:[#allocation0]]
  $region73: #{tpu_custom_call.1} parent=0
    _
  %s10 = ssub.s32 1, %s8
  %s11 = scalar_select 0, %s10, %s8
  %12 = sst [smem:[#allocation5]] %s0
  $region1: #{tpu_custom_call.1} parent=0
    #allocation6 [shape = 'u8[32768]{0}', space=vmem, size = 0x8000, scoped, tag = 'input window, operand 1']
    #allocation7 [shape = 's32[2]{0}', space=sflag, size = 0x8, scoped, tag = 'scoped memory for tpu_custom_call.1']
    #allocation8 [shape = 's32[2]{0}', space=sflag, size = 0x8, scoped, tag = 'scoped memory for tpu_custom_call.1']
    #allocation9 [shape = 'u8[1024]{0}', space=vmem, size = 0x400, scoped, tag = 'output window, operand 0']
    #allocation10 [shape = 'u8[1024]{0}', space=vmem, size = 0x400, scoped, tag = 'output window, operand 1']
    #allocation11 [shape = 's32[2]{0}', space=sflag, size = 0x8, scoped, tag = 'scoped memory for tpu_custom_call.1']
    #allocation12 [shape = 'u8[1024]{0}', space=vmem, size = 0x400, scoped, tag = 'output window, operand 2']
    %13 = vsyncpa [#allocation7], 0
    %s14 = scalar_lea.sflag [#allocation7], 1
    %15 = vsyncpa %s14, 0
    %16 = vsyncpa [#allocation8], 0
    %s17 = scalar_lea.sflag [#allocation8], 1
    %18 = vsyncpa %s17, 0
    %19 = vsyncpa [#allocation11], 0
    %s20 = scalar_lea.sflag [#allocation11], 1
    %21 = vsyncpa %s20, 0
    loop: start=0, step=1, limit=4
    $region2: #{tpu_custom_call.1} parent=1 // loop_pre_header
      _
    $region3: #{tpu_custom_call.1} parent=1 // loop_header
      %s23 = sphi 0, %s27
      %p24 = scmp.ge.s32.totalorder %s23, 4
      %s30 = sphi 0, %s42
      %s31 = sphi 0, %s38
      %s32 = sphi 0, %s30
      %s33 = sphi 0, %s31
      %s34 = sphi 0, %s32
      %s35 = sphi 0, %s33
      %s47 = sphi 0, %s49
      %s50 = sphi 0, %s47
      %s51 = sphi 0, %s50
      %s67 = sphi 0, %s51
      %s73 = sphi 0, %s75
      %s76 = sphi 0, %s73
      %s77 = sphi 0, %s76
      %s93 = sphi 0, %s77
      %s99 = sphi 0, %s101
      %s102 = sphi 0, %s99
      %s103 = sphi 0, %s102
      %s119 = sphi 0, %s103
      %s125 = sphi 0, %s127
      %s128 = sphi 0, %s125
      %s129 = sphi 0, %s128
      %s145 = sphi 0, %s129
      %s151 = sphi 0, %s153
      %s154 = sphi 0, %s151
      %s155 = sphi 0, %s154
      %s171 = sphi 0, %s155
      %s177 = sphi 0, %s179
      %s180 = sphi 0, %s177
      %s181 = sphi 0, %s180
      %s197 = sphi 0, %s181
    $region4: #{tpu_custom_call.1} parent=1 // loop_header_branch
      %26 = sbr.rel (%p24) target = $region8
    $region5: #{tpu_custom_call.1} parent=1 // loop_body
      %s28 = ssub.s32 %s23, 1
      %s29 = ssub.s32 %s23, 2
      %s36 = sadd.s32 1, %s31
      %p37 = scmp.ge.s32.totalorder %s36, 1
      %s38 = scalar_select %p37, 0, %s36
      %s39 = sadd.s32 1, %s30
      %s40 = scalar_select %p37, %s39, %s30
      %p41 = scmp.ge.s32.totalorder %s40, 2
      %s42 = scalar_select %p41, 0, %s40
      %s43 = ssub.s32 %s31, %s38
      %s44 = ssub.s32 %s30, %s42
      %s45 = sor.u32 %s43, %s44
      %p46 = scmp.eq.s32.totalorder %s45, 0
      %s48 = sadd.s32 %s47, 1
      %s49 = scalar_select %p46, %s47, %s48
      %p52 = pneg %p46
      %p53 = scmp.eq.s32.totalorder %s23, 1
      %p54 = por %p52, %p53
      %p55 = scmp.ne.s32.totalorder %s47, %s50
      %p56 = scmp.eq.s32.totalorder %s23, 0
      %p57 = por %p55, %p56
      %p58 = scmp.ne.s32.totalorder %s47, %s50
      %p59 = scmp.eq.s32.totalorder %s28, 1
      %p60 = por %p58, %p59
      %p61 = scmp.ne.s32.totalorder %s50, %s51
      %p62 = scmp.eq.s32.totalorder %s28, 0
      %p63 = por %p61, %p62
      %p64 = scmp.ne.s32.totalorder %s50, %s51
      %p65 = scmp.eq.s32.totalorder %s29, 1
      %p66 = por %p64, %p65
      %p68 = scmp.ne.s32.totalorder %s51, %s67
      %p69 = scmp.eq.s32.totalorder %s29, 0
      %p70 = por %p68, %p69
      %s71 = ssub.s32 %s30, %s42
      %p72 = scmp.eq.s32.totalorder %s71, 0
      %s74 = sadd.s32 %s73, 1
      %s75 = scalar_select %p72, %s73, %s74
      %p78 = pneg %p72
      %p79 = scmp.eq.s32.totalorder %s23, 1
      %p80 = por %p78, %p79
      %p81 = scmp.ne.s32.totalorder %s73, %s76
      %p82 = scmp.eq.s32.totalorder %s23, 0
      %p83 = por %p81, %p82
      %p84 = scmp.ne.s32.totalorder %s73, %s76
      %p85 = scmp.eq.s32.totalorder %s28, 1
      %p86 = por %p84, %p85
      %p87 = scmp.ne.s32.totalorder %s76, %s77
      %p88 = scmp.eq.s32.totalorder %s28, 0
      %p89 = por %p87, %p88
      %p90 = scmp.ne.s32.totalorder %s76, %s77
      %p91 = scmp.eq.s32.totalorder %s29, 1
      %p92 = por %p90, %p91
      %p94 = scmp.ne.s32.totalorder %s77, %s93
      %p95 = scmp.eq.s32.totalorder %s29, 0
      %p96 = por %p94, %p95
      %s97 = ssub.s32 %s30, %s42
      %p98 = scmp.eq.s32.totalorder %s97, 0
      %s100 = sadd.s32 %s99, 1
      %s101 = scalar_select %p98, %s99, %s100
      %p104 = pneg %p98
      %p105 = scmp.eq.s32.totalorder %s23, 1
      %p106 = por %p104, %p105
      %p107 = scmp.ne.s32.totalorder %s99, %s102
      %p108 = scmp.eq.s32.totalorder %s23, 0
      %p109 = por %p107, %p108
      %p110 = scmp.ne.s32.totalorder %s99, %s102
      %p111 = scmp.eq.s32.totalorder %s28, 1
      %p112 = por %p110, %p111
      %p113 = scmp.ne.s32.totalorder %s102, %s103
      %p114 = scmp.eq.s32.totalorder %s28, 0
      %p115 = por %p113, %p114
      %p116 = scmp.ne.s32.totalorder %s102, %s103
      %p117 = scmp.eq.s32.totalorder %s29, 1
      %p118 = por %p116, %p117
      %p120 = scmp.ne.s32.totalorder %s103, %s119
      %p121 = scmp.eq.s32.totalorder %s29, 0
      %p122 = por %p120, %p121
      %s123 = ssub.s32 %s30, %s42
      %p124 = scmp.eq.s32.totalorder %s123, 0
      %s126 = sadd.s32 %s125, 1
      %s127 = scalar_select %p124, %s125, %s126
      %p130 = pneg %p124
      %p131 = scmp.eq.s32.totalorder %s23, 1
      %p132 = por %p130, %p131
      %p133 = scmp.ne.s32.totalorder %s125, %s128
      %p134 = scmp.eq.s32.totalorder %s23, 0
      %p135 = por %p133, %p134
      %p136 = scmp.ne.s32.totalorder %s125, %s128
      %p137 = scmp.eq.s32.totalorder %s28, 1
      %p138 = por %p136, %p137
      %p139 = scmp.ne.s32.totalorder %s128, %s129
      %p140 = scmp.eq.s32.totalorder %s28, 0
      %p141 = por %p139, %p140
      %p142 = scmp.ne.s32.totalorder %s128, %s129
      %p143 = scmp.eq.s32.totalorder %s29, 1
      %p144 = por %p142, %p143
      %p146 = scmp.ne.s32.totalorder %s129, %s145
      %p147 = scmp.eq.s32.totalorder %s29, 0
      %p148 = por %p146, %p147
      %s149 = ssub.s32 %s30, %s42
      %p150 = scmp.eq.s32.totalorder %s149, 0
      %s152 = sadd.s32 %s151, 1
      %s153 = scalar_select %p150, %s151, %s152
      %p156 = pneg %p150
      %p157 = scmp.eq.s32.totalorder %s23, 1
      %p158 = por %p156, %p157
      %p159 = scmp.ne.s32.totalorder %s151, %s154
      %p160 = scmp.eq.s32.totalorder %s23, 0
      %p161 = por %p159, %p160
      %p162 = scmp.ne.s32.totalorder %s151, %s154
      %p163 = scmp.eq.s32.totalorder %s28, 1
      %p164 = por %p162, %p163
      %p165 = scmp.ne.s32.totalorder %s154, %s155
      %p166 = scmp.eq.s32.totalorder %s28, 0
      %p167 = por %p165, %p166
      %p168 = scmp.ne.s32.totalorder %s154, %s155
      %p169 = scmp.eq.s32.totalorder %s29, 1
      %p170 = por %p168, %p169
      %p172 = scmp.ne.s32.totalorder %s155, %s171
      %p173 = scmp.eq.s32.totalorder %s29, 0
      %p174 = por %p172, %p173
      %s175 = ssub.s32 %s30, %s42
      %p176 = scmp.eq.s32.totalorder %s175, 0
      %s178 = sadd.s32 %s177, 1
      %s179 = scalar_select %p176, %s177, %s178
      %p182 = pneg %p176
      %p183 = scmp.eq.s32.totalorder %s23, 1
      %p184 = por %p182, %p183
      %p185 = scmp.ne.s32.totalorder %s177, %s180
      %p186 = scmp.eq.s32.totalorder %s23, 0
      %p187 = por %p185, %p186
      %p188 = scmp.ne.s32.totalorder %s177, %s180
      %p189 = scmp.eq.s32.totalorder %s28, 1
      %p190 = por %p188, %p189
      %p191 = scmp.ne.s32.totalorder %s180, %s181
      %p192 = scmp.eq.s32.totalorder %s28, 0
      %p193 = por %p191, %p192
      %p194 = scmp.ne.s32.totalorder %s180, %s181
      %p195 = scmp.eq.s32.totalorder %s29, 1
      %p196 = por %p194, %p195
      %p198 = scmp.ne.s32.totalorder %s181, %s197
      %p199 = scmp.eq.s32.totalorder %s29, 0
      %p200 = por %p198, %p199
      %p201 = scmp.le.s32.totalorder 1, %s23
      %p202 = scmp.lt.s32.totalorder %s23, 3
      %p203 = pnand %p201, %p202
      %p204 = pneg %p203
      // Predicated region
      $region9: #{tpu_custom_call.1} parent=5 // pred_check
        _
      $region10: #{tpu_custom_call.1} parent=5 // pred_check_branch
        %206 = sbr.rel (%p203) target = $region12
      $region11: #{tpu_custom_call.1} parent=5 // pred_region
        %s207 = ssub.s32 %s23, 1
      $region12: #{tpu_custom_call.1} parent=5 // pred_fallthru
        _
      %p208 = scmp.lt.s32.totalorder %s23, 2
      // Predicated region
      $region13: #{tpu_custom_call.1} parent=5 // pred_check
        %p209 = pneg %p208
      $region14: #{tpu_custom_call.1} parent=5 // pred_check_branch
        %211 = sbr.rel (%p209) target = $region16
      $region15: #{tpu_custom_call.1} parent=5 // pred_region
        // Predicated region
        $region17: #{tpu_custom_call.1} parent=15 // pred_check
          %p212 = pneg %p57
        $region18: #{tpu_custom_call.1} parent=15 // pred_check_branch
          %214 = sbr.rel (%p212) target = $region20
        $region19: #{tpu_custom_call.1} parent=15 // pred_region
          %s215 = sand.u32 %s47, 1
          %s216 = scalar_lea.sflag [#allocation7], %s215
          %s217 = sand.u32 %s47, 1
          %s218 = smul.addr %s217, 32
          %s219 = scalar_lea.vmem [#allocation6], %s218
          %s220 = smul.u32 4, %s31
          %s222 = ssub.s32 512, 512
          %223 = vsyncadd %s216, %s222
          %s224 = smul.addr %s220, 2
          %s225 = sadd.s32 %s30, %s224
          %s226 = smul.addr %s225, 128
          %s227 = scalar_lea.hbm %s1, %s226
          %s228 = sshll.u32 %s219, 4
          %s229 = int_to_ptr.vmem [resolvable:$true] %s228
          %234 = dma.hbm_to_vmem [thread:$0]  %s227, 512, %s229, %s216, 256, 128, 8
        $region20: #{tpu_custom_call.1} parent=15 // pred_fallthru
          _
        // Predicated region
        $region21: #{tpu_custom_call.1} parent=15 // pred_check
          %p235 = pneg %p83
        $region22: #{tpu_custom_call.1} parent=15 // pred_check_branch
          %237 = sbr.rel (%p235) target = $region24
        $region23: #{tpu_custom_call.1} parent=15 // pred_region
          %p238 = scmp.lt.s32.totalorder %s30, 1
          %s239 = scalar_select %p238, %s30, 1
          %s240 = scalar_lea.vmem %s2, %s239
        $region24: #{tpu_custom_call.1} parent=15 // pred_fallthru
          _
        // Predicated region
        $region25: #{tpu_custom_call.1} parent=15 // pred_check
          %p241 = pneg %p109
        $region26: #{tpu_custom_call.1} parent=15 // pred_check_branch
          %243 = sbr.rel (%p241) target = $region28
        $region27: #{tpu_custom_call.1} parent=15 // pred_region
          %p244 = scmp.lt.s32.totalorder %s30, 1
          %s245 = scalar_select %p244, %s30, 1
          %s246 = scalar_lea.vmem %s3, %s245
        $region28: #{tpu_custom_call.1} parent=15 // pred_fallthru
          _
      $region16: #{tpu_custom_call.1} parent=5 // pred_fallthru
        _
      %p247 = scmp.le.s32.totalorder 1, %s23
      %p248 = scmp.lt.s32.totalorder %s23, 3
      %p249 = pnand %p247, %p248
      %p250 = pneg %p249
      // Predicated region
      $region29: #{tpu_custom_call.1} parent=5 // pred_check
        _
      $region30: #{tpu_custom_call.1} parent=5 // pred_check_branch
        %252 = sbr.rel (%p249) target = $region32
      $region31: #{tpu_custom_call.1} parent=5 // pred_region
        %s253 = ssub.s32 %s23, 1
        %s254 = sand.u32 %s50, 1
        %s255 = scalar_lea.sflag [#allocation7], %s254
        %s256 = sand.u32 %s50, 1
        %s257 = smul.addr %s256, 32
        %s258 = scalar_lea.vmem [#allocation6], %s257
        // Predicated region
        $region33: #{tpu_custom_call.1} parent=31 // pred_check
          %p259 = pneg %p63
        $region34: #{tpu_custom_call.1} parent=31 // pred_check_branch
          %261 = sbr.rel (%p259) target = $region36
        $region35: #{tpu_custom_call.1} parent=31 // pred_region
          %262 = dma.done %s255, 512
        $region36: #{tpu_custom_call.1} parent=31 // pred_fallthru
          _
        %s263 = sand.u32 %s50, 1
        %s264 = scalar_lea.sflag [#allocation7], %s263
        %s265 = sand.u32 %s50, 1
        %s266 = smul.addr %s265, 32
        %s267 = scalar_lea.vmem [#allocation6], %s266
        %p268 = pneg %p63
        %p269 = pneg %p60
        %p270 = scmp.lt.s32.totalorder %s32, 1
        %s271 = scalar_select %p270, %s32, 1
        %s272 = scalar_lea.vmem %s2, %s271
        %p273 = pneg %p89
        %p274 = pneg %p86
        %p275 = scmp.lt.s32.totalorder %s32, 1
        %s276 = scalar_select %p275, %s32, 1
        %s277 = scalar_lea.vmem %s3, %s276
        %p278 = pneg %p115
        %p279 = pneg %p112
        %p280 = pneg %p141
        %p281 = pneg %p138
        %s282 = sand.u32 %s128, 1
        %s283 = scalar_lea.sflag [#allocation8], %s282
        %s284 = sand.u32 %s128, 1
        %s285 = scalar_lea.vmem [#allocation9], %s284
        %p286 = pneg %p167
        %p287 = pneg %p164
        %s288 = sand.u32 %s28, 1
        %s289 = scalar_lea.sflag [#allocation11], %s288
        %s290 = sand.u32 %s154, 1
        %s291 = scalar_lea.vmem [#allocation10], %s290
        %p292 = pneg %p193
        %p293 = pneg %p190
        %s294 = sand.u32 %s28, 1
        %s295 = scalar_lea.sflag [#allocation11], %s294
        %s296 = sand.u32 %s180, 1
        %s297 = scalar_lea.vmem [#allocation12], %s296
        %s298 = smul.u32 4, %s33
        %p299 = scmp.lt.s32.totalorder %s32, 1
        %s300 = scalar_select %p299, %s32, 1
        %s301 = scalar_lea.vmem %s2, %s300
        %p302 = scmp.lt.s32.totalorder %s32, 1
        %s303 = scalar_select %p302, %s32, 1
        %s304 = scalar_lea.vmem %s3, %s303
        %p305 = scmp.eq.s32.totalorder %s33, 0
        // Predicated region
        $region37: #{tpu_custom_call.1} parent=31 // pred_check
          %p306 = pneg %p305
        $region38: #{tpu_custom_call.1} parent=31 // pred_check_branch
          %308 = sbr.rel (%p306) target = $region40
        $region39: #{tpu_custom_call.1} parent=31 // pred_region
          %309 = vst [vmem:[#allocation2] sm:$0x1] 0.0
          %310 = vst [vmem:[#allocation3] sm:$0x1] 0.0
        $region40: #{tpu_custom_call.1} parent=31 // pred_fallthru
          _
        %v311 = vld [vmem:[%s258] sm:$0xff]
        %v312 = vld [vmem:[%s258 + $0x8] sm:$0xff]
        %v313 = vld [vmem:[%s258 + $0x10] sm:$0xff]
        %v314 = vld [vmem:[%s258 + $0x18] sm:$0xff]
        %v315 = vld [vmem:[%s301] sm:$0x1]
        %v317 = vlaneseq
        %v318 = vshrl.u32 %v317, 7
        %v319 = vsub.s32 0, %v318
        %v320 = vrot.slane %v315, %v319
        %v322 = vsub.f32 %v311, %v320
        %v323 = vsub.f32 %v312, %v320
        %v324 = vsub.f32 %v313, %v320
        %v325 = vsub.f32 %v314, %v320
        %v326 = vld [vmem:[#allocation2] sm:$0x1]
        %v327 = vadd.f32 %v322, %v323
        %v328 = vadd.f32 %v327, %v324
        %v329 = vadd.f32 %v328, %v325
        %v330 = vrot.slane %v329, 4
        %v331 = vadd.f32 %v329, %v330
        %v332 = vrot.slane %v331, 2
        %v333 = vadd.f32 %v331, %v332
        %v334 = vrot.slane %v333, 1
        %v335 = vadd.f32 %v333, %v334
        %v336 = vadd.f32 %v326, %v335
        %337 = vst [vmem:[#allocation2] sm:$0x1] %v336
        %v338 = vld [vmem:[#allocation3] sm:$0x1]
        %v339 = vmul.f32 %v322, %v322
        %v340 = vmul.f32 %v323, %v323
        %v341 = vmul.f32 %v324, %v324
        %v342 = vmul.f32 %v325, %v325
        %v343 = vadd.f32 %v339, %v340
        %v344 = vadd.f32 %v343, %v341
        %v345 = vadd.f32 %v344, %v342
        %v346 = vrot.slane %v345, 4
        %v347 = vadd.f32 %v345, %v346
        %v348 = vrot.slane %v347, 2
        %v349 = vadd.f32 %v347, %v348
        %v350 = vrot.slane %v349, 1
        %v351 = vadd.f32 %v349, %v350
        %v352 = vadd.f32 %v338, %v351
        %353 = vst [vmem:[#allocation3] sm:$0x1] %v352
        // Predicated region
        $region41: #{tpu_custom_call.1} parent=31 // pred_check
          %p354 = pneg %p305
        $region42: #{tpu_custom_call.1} parent=31 // pred_check_branch
          %356 = sbr.rel (%p354) target = $region44
        $region43: #{tpu_custom_call.1} parent=31 // pred_region
          %s357 = sld [smem:[#allocation5]]
          %s358 = scvt.s32.f32 %s357
          %s359 = sadd.f32 %s358, 32.0
          %v360 = vld [vmem:[#allocation2] sm:$0x1]
          %v361 = vrcp.pop 32.0
          %v362 = vmul.f32 %v360, %v361
          %v363 = vld [vmem:[#allocation3] sm:$0x1]
          %v364 = vmul.f32 %v363, %v361
          %v365 = vmul.f32 %v362, %v362
          %v366 = vsub.f32 %v364, %v365
          %v367 = vmax.f32 %v366, 0.0
          %v368 = vld [vmem:[%s301] sm:$0x1]
          %v369 = vstv %s359
          %v370 = vrcp.pop %v369
          %s371 = vtos %v370
          %s372 = smul.f32 32.0, %s371
          %v373 = vstv %s372
          %v374 = vmul.f32 %v373, %v362
          %v375 = vadd.f32 %v368, %v374
          %v376 = vstv %s359
          %v377 = vrcp.pop %v376
          %s378 = vtos %v377
          %s379 = smul.f32 %s358, %s378
          %v380 = vstv %s379
          %v381 = vmul.f32 %v362, %v380
          %v382 = vld [vmem:[%s304] sm:$0x1]
          %v383 = vstv %s358
          %v384 = vmul.f32 %v382, %v383
          %v385 = vmul.f32 %v367, 32.0
          %v386 = vadd.f32 %v384, %v385
          %v387 = vmul.f32 %v381, %v381
          %s388 = smul.f32 %s358, 32.0
          %v389 = vstv %s359
          %v390 = vrcp.pop %v389
          %s391 = vtos %v390
          %s392 = smul.f32 %s388, %s391
          %v393 = vstv %s392
          %v394 = vmul.f32 %v387, %v393
          %v395 = vadd.f32 %v386, %v394
          %v396 = vstv %s359
          %v397 = vrcp.pop %v396
          %v398 = vmul.f32 %v395, %v397
          %399 = vst [vmem:[%s285] sm:$0x1] %v375
          %400 = vst [vmem:[%s291] sm:$0x1] %v398
          %v401 = vrsqrt.pop %v398
          %v402 = vmul.f32 %v398, %v401
          %vm403 = vcmp.eq.f32.partialorder %v398, inf
          %v404 = vsel %vm403, %v398, %v402
          %vm405 = vcmp.eq.f32.partialorder %v398, 0.0
          %v406 = vand.u32 %v398, 2147483648
          %v407 = vsel %vm405, %v406, %v404
          %408 = vst [vmem:[%s297] sm:$0x1] %v407
        $region44: #{tpu_custom_call.1} parent=31 // pred_fallthru
          _
        %s409 = sand.u32 %s128, 1
        %s410 = scalar_lea.sflag [#allocation8], %s409
        %s411 = sand.u32 %s128, 1
        %s412 = scalar_lea.vmem [#allocation9], %s411
        %s413 = sand.u32 %s28, 1
        %s414 = scalar_lea.sflag [#allocation11], %s413
        %s415 = sand.u32 %s154, 1
        %s416 = scalar_lea.vmem [#allocation10], %s415
        %s417 = sand.u32 %s28, 1
        %s418 = scalar_lea.sflag [#allocation11], %s417
        %s419 = sand.u32 %s180, 1
        %s420 = scalar_lea.vmem [#allocation12], %s419
        // Predicated region
        $region45: #{tpu_custom_call.1} parent=31 // pred_check
          %p421 = pneg %p138
        $region46: #{tpu_custom_call.1} parent=31 // pred_check_branch
          %423 = sbr.rel (%p421) target = $region48
        $region47: #{tpu_custom_call.1} parent=31 // pred_region
          %s425 = ssub.s32 16, 16
          %426 = vsyncadd %s410, %s425
          %s427 = smul.addr %s32, 16
          %s428 = scalar_lea.hbm %s4, %s427
          %s430 = sshll.u32 %s412, 4
          %s431 = int_to_ptr.vmem [resolvable:$true] %s430
          %433 = dma.vmem_to_hbm [thread:$0]  %s431, 16, %s428, %s410
        $region48: #{tpu_custom_call.1} parent=31 // pred_fallthru
          _
        // Predicated region
        $region49: #{tpu_custom_call.1} parent=31 // pred_check
          %p434 = pneg %p164
        $region50: #{tpu_custom_call.1} parent=31 // pred_check_branch
          %436 = sbr.rel (%p434) target = $region52
        $region51: #{tpu_custom_call.1} parent=31 // pred_region
          %s438 = ssub.s32 16, 16
          %439 = vsyncadd %s414, %s438
          %s440 = smul.addr %s32, 16
          %s441 = scalar_lea.hbm %s5, %s440
          %s443 = sshll.u32 %s416, 4
          %s444 = int_to_ptr.vmem [resolvable:$true] %s443
          %446 = dma.vmem_to_hbm [thread:$0]  %s444, 16, %s441, %s414
        $region52: #{tpu_custom_call.1} parent=31 // pred_fallthru
          _
        // Predicated region
        $region53: #{tpu_custom_call.1} parent=31 // pred_check
          %p447 = pneg %p190
        $region54: #{tpu_custom_call.1} parent=31 // pred_check_branch
          %449 = sbr.rel (%p447) target = $region56
        $region55: #{tpu_custom_call.1} parent=31 // pred_region
          %s451 = ssub.s32 16, 16
          %452 = vsyncadd %s418, %s451
          %s453 = smul.addr %s32, 16
          %s454 = scalar_lea.hbm %s6, %s453
          %s456 = sshll.u32 %s420, 4
          %s457 = int_to_ptr.vmem [resolvable:$true] %s456
          %459 = dma.vmem_to_hbm [thread:$0]  %s457, 16, %s454, %s418
        $region56: #{tpu_custom_call.1} parent=31 // pred_fallthru
          _
      $region32: #{tpu_custom_call.1} parent=5 // pred_fallthru
        _
      %p460 = scmp.le.s32.totalorder 2, %s23
      // Predicated region
      $region57: #{tpu_custom_call.1} parent=5 // pred_check
        %p461 = pneg %p460
      $region58: #{tpu_custom_call.1} parent=5 // pred_check_branch
        %463 = sbr.rel (%p461) target = $region60
      $region59: #{tpu_custom_call.1} parent=5 // pred_region
        %s464 = ssub.s32 %s23, 2
        // Predicated region
        $region61: #{tpu_custom_call.1} parent=59 // pred_check
          %p465 = pneg %p144
        $region62: #{tpu_custom_call.1} parent=59 // pred_check_branch
          %467 = sbr.rel (%p465) target = $region64
        $region63: #{tpu_custom_call.1} parent=59 // pred_region
          %s468 = sand.u32 %s129, 1
          %s469 = scalar_lea.sflag [#allocation8], %s468
          %s470 = sand.u32 %s129, 1
          %s471 = scalar_lea.vmem [#allocation9], %s470
          %472 = dma.done %s469, 16
        $region64: #{tpu_custom_call.1} parent=59 // pred_fallthru
          _
        // Predicated region
        $region65: #{tpu_custom_call.1} parent=59 // pred_check
          %p473 = pneg %p170
        $region66: #{tpu_custom_call.1} parent=59 // pred_check_branch
          %475 = sbr.rel (%p473) target = $region68
        $region67: #{tpu_custom_call.1} parent=59 // pred_region
          %s476 = sand.u32 %s29, 1
          %s477 = scalar_lea.sflag [#allocation11], %s476
          %s478 = sand.u32 %s155, 1
          %s479 = scalar_lea.vmem [#allocation10], %s478
          %480 = dma.done %s477, 16
        $region68: #{tpu_custom_call.1} parent=59 // pred_fallthru
          _
        // Predicated region
        $region69: #{tpu_custom_call.1} parent=59 // pred_check
          %p481 = pneg %p196
        $region70: #{tpu_custom_call.1} parent=59 // pred_check_branch
          %483 = sbr.rel (%p481) target = $region72
        $region71: #{tpu_custom_call.1} parent=59 // pred_region
          %s484 = sand.u32 %s29, 1
          %s485 = scalar_lea.sflag [#allocation11], %s484
          %s486 = sand.u32 %s181, 1
          %s487 = scalar_lea.vmem [#allocation12], %s486
          %488 = dma.done %s485, 16
        $region72: #{tpu_custom_call.1} parent=59 // pred_fallthru
          _
      $region60: #{tpu_custom_call.1} parent=5 // pred_fallthru
        _
    $region6: #{tpu_custom_call.1} parent=1 // loop_footer
      %s27 = sadd.s32 1, %s23
    $region7: #{tpu_custom_call.1} parent=1 // loop_footer_branch
      %22 = sbr.rel target = $region3
    $region8: #{tpu_custom_call.1} parent=1 // loop_exit
      _
    %489 = vsyncpa [#allocation7], 1
    %s490 = scalar_lea.sflag [#allocation7], 1
    %491 = vsyncpa %s490, 1
    %492 = vsyncpa [#allocation8], 1
    %s493 = scalar_lea.sflag [#allocation8], 1
    %494 = vsyncpa %s493, 1
    %495 = vsyncpa [#allocation11], 1
    %s496 = scalar_lea.sflag [#allocation11], 1
    %497 = vsyncpa %s496, 1

</llo_original>
